<compile_context>
chip_gen: v7x
topology: tpu7x:2x2x1
jax: 0.10.0
libtpu: 0.0.40
codegen_flags: <defaults>
</compile_context>

<pallas_src>
import math
import functools

import jax
import jax.numpy as jnp
from jax import lax
from jax.experimental import pallas as pl
from jax.experimental.pallas import tpu as pltpu


DEFAULT_MASK_VALUE = -0.7 * float(jnp.finfo(jnp.float32).max)


# ---------------------------------------------------------------------------
# Kernel A: qkv projection, lane-dense outputs q/k/v : (B, T, C) bf16
# ---------------------------------------------------------------------------
def qkv_proj_kernel(x_ref, w3_ref, b3_ref, q_ref, k_ref, v_ref):
    x = x_ref[0]                                           # (blk, C) bf16
    for i, out in enumerate((q_ref, k_ref, v_ref)):        # static unroll (3)
        z = jnp.dot(x, w3_ref[i],
                    preferred_element_type=jnp.float32) + b3_ref[i]   # (blk, C) f32
        out[0] = z.astype(out.dtype)                       # full-width, lane-dense store


# ---------------------------------------------------------------------------
# Kernel B: flash attention (all heads per step) + fused output projection
# grid = (B, num_q_tiles, num_kv_tiles); kv axis is the (arbitrary) reduction.
# ---------------------------------------------------------------------------
def flash_attn_proj_kernel(q_ref, k_ref, v_ref, wproj_ref, bproj_ref, o_ref,
                           m_ref, l_ref, acc_ref,
                           *, n_head, head_dim, block_q, block_kv):
    qi = pl.program_id(1)
    ki = pl.program_id(2)
    hd = head_dim

    # Fresh online-softmax state for every (batch, q-tile).
    @pl.when(ki == 0)
    def _init():
        m_ref[...] = jnp.full_like(m_ref, DEFAULT_MASK_VALUE)
        l_ref[...] = jnp.zeros_like(l_ref)
        acc_ref[...] = jnp.zeros_like(acc_ref)

    def attend(masked):
        q = q_ref[0]                                       # (block_q, C) bf16, pre-scaled
        k = k_ref[0]                                       # (block_kv, C) bf16
        v = v_ref[0]                                       # (block_kv, C) bf16
        if masked:
            # Diagonal tile only (block_q == block_kv, ki == qi): in-tile mask.
            row = lax.broadcasted_iota(jnp.int32, (block_q, block_kv), 0)
            col = lax.broadcasted_iota(jnp.int32, (block_q, block_kv), 1)
            causal = row >= col
        for h in range(n_head):                            # static unroll over heads
            sl = slice(h * hd, (h + 1) * hd)
            # q_h @ k_h^T without an explicit transpose.
            s = lax.dot_general(q[:, sl], k[:, sl], (((1,), (1,)), ((), ())),
                                preferred_element_type=jnp.float32)   # (bq, bkv)
            if masked:
                s = jnp.where(causal, s, DEFAULT_MASK_VALUE)
            m_prev = m_ref[:, h:h + 1]
            m_new = jnp.maximum(m_prev, jnp.max(s, axis=-1, keepdims=True))
            alpha = jnp.exp(m_prev - m_new)
            p = jnp.exp(s - m_new)                                     # f32
            l_ref[:, h:h + 1] = alpha * l_ref[:, h:h + 1] + jnp.sum(
                p, axis=-1, keepdims=True)
            acc_ref[:, sl] = alpha * acc_ref[:, sl] + jnp.dot(
                p.astype(v.dtype), v[:, sl], preferred_element_type=jnp.float32)
            m_ref[:, h:h + 1] = m_new

    # Strictly-below-diagonal kv tiles: no masking needed.
    @pl.when(ki < qi)
    def _unmasked():
        attend(masked=False)

    # Diagonal kv tile: masked attend, then finalize + fused output projection.
    @pl.when(ki == qi)
    def _diag_and_finish():
        attend(masked=True)
        parts = []
        for h in range(n_head):                            # epilogue, once per q-tile
            sl = slice(h * hd, (h + 1) * hd)
            inv_l = pl.reciprocal(l_ref[:, h:h + 1], approx=True)
            parts.append((acc_ref[:, sl] * inv_l).astype(wproj_ref.dtype))
        y = jnp.concatenate(parts, axis=1)                 # (block_q, C) bf16, lane-dense
        # Single K=C projection matmul (full MXU depth) with the resident w_proj.
        o = jnp.dot(y, wproj_ref[...],
                    preferred_element_type=jnp.float32) + bproj_ref[0]
        o_ref[0] = o.astype(o_ref.dtype)
    # Steps with ki > qi do nothing; their K/V index maps are clamped to qi so
    # no DMA is issued either.
    # TODO(synk): a PrefetchScalarGridSpec schedule table of lower-triangular
    # (qi, ki) pairs would also remove the residual ~0.35us/step overhead of
    # those dead steps.


# ---------------------------------------------------------------------------
# Wrapper
# ---------------------------------------------------------------------------
def causal_self_attention(x, w_qkv, b_qkv, w_proj, b_proj, *, n_head, block=256):
    """x: (B, T, C). w_qkv: (C, 3C), b_qkv: (3C,), w_proj: (C, C), b_proj: (C,)."""
    B, T, C = x.shape
    assert C % n_head == 0
    hd = C // n_head
    blk = min(block, T)
    assert T % blk == 0 and (blk % 8 == 0 or blk == T), \
        "sequence length must tile by the block size (multiple of 8)"
    nq = T // blk

    # Fold the 1/sqrt(hd) attention scale into the Q columns of the projection.
    scale = 1.0 / math.sqrt(hd)
    w_qkv_s = w_qkv.at[:, :C].multiply(scale)
    b_qkv_s = b_qkv.at[:C].multiply(scale)

    cdtype = jnp.bfloat16                           # MXU operands; accumulate in f32
    x_c = x.astype(cdtype)
    # (C, 3C) -> (3, C, C): w3[0]=Q, w3[1]=K, w3[2]=V weights.
    w3 = w_qkv_s.reshape(C, 3, C).transpose(1, 0, 2).astype(cdtype)
    b3 = b_qkv_s.reshape(3, 1, C).astype(jnp.float32)
    w_proj_c = w_proj.astype(cdtype)
    b_proj2 = b_proj.reshape(1, C).astype(jnp.float32)

    # ---- Kernel A: QKV projection, lane-dense (B, T, C) outputs ----
    qkv_shape = jax.ShapeDtypeStruct((B, T, C), cdtype)
    q, k, v = pl.pallas_call(
        qkv_proj_kernel,
        out_shape=(qkv_shape, qkv_shape, qkv_shape),
        grid_spec=pltpu.PrefetchScalarGridSpec(
            num_scalar_prefetch=0,
            grid=(B, nq),
            in_specs=[
                pl.BlockSpec((1, blk, C), lambda b, i: (b, i, 0)),      # x row tile
                pl.BlockSpec((3, C, C), lambda b, i: (0, 0, 0)),        # W (resident)
                pl.BlockSpec((3, 1, C), lambda b, i: (0, 0, 0)),        # bias (resident)
            ],
            out_specs=[
                pl.BlockSpec((1, blk, C), lambda b, i: (b, i, 0)),
                pl.BlockSpec((1, blk, C), lambda b, i: (b, i, 0)),
                pl.BlockSpec((1, blk, C), lambda b, i: (b, i, 0)),
            ],
        ),
        compiler_params=pltpu.CompilerParams(
            dimension_semantics=("parallel", "parallel")),
    )(x_c, w3, b3)

    # ---- Kernel B: flash attention (all heads per step) + output projection ----
    flash_kernel = functools.partial(
        flash_attn_proj_kernel,
        n_head=n_head, head_dim=hd, block_q=blk, block_kv=blk)
    out = pl.pallas_call(
        flash_kernel,
        out_shape=jax.ShapeDtypeStruct((B, T, C), x.dtype),
        grid_spec=pltpu.PrefetchScalarGridSpec(
            num_scalar_prefetch=0,
            grid=(B, nq, nq),                               # kv axis innermost (reduction)
            in_specs=[
                pl.BlockSpec((1, blk, C), lambda b, qi, ki: (b, qi, 0)),   # q
                # Clamp to the diagonal: fully-masked kv tiles re-use the
                # resident block, so no DMA is issued for them.
                pl.BlockSpec((1, blk, C),
                             lambda b, qi, ki: (b, jnp.minimum(ki, qi), 0)),  # k
                pl.BlockSpec((1, blk, C),
                             lambda b, qi, ki: (b, jnp.minimum(ki, qi), 0)),  # v
                pl.BlockSpec((C, C), lambda b, qi, ki: (0, 0)),            # w_proj resident
                pl.BlockSpec((1, C), lambda b, qi, ki: (0, 0)),            # b_proj resident
            ],
            out_specs=pl.BlockSpec((1, blk, C), lambda b, qi, ki: (b, qi, 0)),
            scratch_shapes=[
                pltpu.VMEM((blk, n_head), jnp.float32),   # m (running max, per head)
                pltpu.VMEM((blk, n_head), jnp.float32),   # l (running denom, per head)
                pltpu.VMEM((blk, C), jnp.float32),        # attention accumulator (all heads)
            ],
        ),
        compiler_params=pltpu.CompilerParams(
            dimension_semantics=("parallel", "parallel", "arbitrary")),
    )(q, k, v, w_proj_c, b_proj2)
    return out


# ---------------------------------------------------------------------------
# Pure-JAX reference mirroring the PyTorch forward
# ---------------------------------------------------------------------------
def reference(x, w_qkv, b_qkv, w_proj, b_proj, n_head):
    B, T, C = x.shape
    hd = C // n_head
    qkv = x @ w_qkv + b_qkv
    q, k, v = jnp.split(qkv, 3, axis=2)
    q = q.reshape(B, T, n_head, hd).transpose(0, 2, 1, 3)
    k = k.reshape(B, T, n_head, hd).transpose(0, 2, 1, 3)
    v = v.reshape(B, T, n_head, hd).transpose(0, 2, 1, 3)
    att = (q @ k.transpose(0, 1, 3, 2)) * (1.0 / math.sqrt(hd))
    mask = jnp.tril(jnp.ones((T, T), dtype=bool))
    att = jnp.where(mask[None, None], att, -jnp.inf)
    att = jax.nn.softmax(att, axis=-1)
    y = att @ v
    y = y.transpose(0, 2, 1, 3).reshape(B, T, C)
    return y @ w_proj + b_proj


if __name__ == "__main__":
    # Small config consistent with the module: n_embd % n_head == 0
    B, T, C, n_head = 2, 8, 32, 4

    key = jax.random.PRNGKey(0)
    kx, k1, k2, k3, k4 = jax.random.split(key, 5)

    bound = 1.0 / math.sqrt(C)
    w_qkv = jax.random.uniform(k1, (C, 3 * C), jnp.float32, -bound, bound)
    b_qkv = jax.random.uniform(k2, (3 * C,), jnp.float32, -bound, bound)
    w_proj = jax.random.uniform(k3, (C, C), jnp.float32, -bound, bound)
    b_proj = jax.random.uniform(k4, (C,), jnp.float32, -bound, bound)
    x = jax.random.normal(kx, (B, T, C), jnp.float32)

    y = causal_self_attention(x, w_qkv, b_qkv, w_proj, b_proj, n_head=n_head)
    y = jax.block_until_ready(y)

    y_ref = reference(x, w_qkv, b_qkv, w_proj, b_proj, n_head)
    assert y.shape == (B, T, C)
    # bf16 MXU operands -> loosened tolerance vs the f32 reference.
    max_err = float(jnp.max(jnp.abs(y - y_ref)))
    assert jnp.allclose(y, y_ref, atol=5e-2, rtol=5e-2), \
        f"mismatch vs JAX reference (max abs err {max_err})"

    print("KERNEL_OK")
</pallas_src>

<mosaic_0001>
module attributes {stable_mosaic.version = 11 : i64} {
  func.func @qkv_proj_kernel(%arg0: i32, %arg1: i32, %arg2: memref<1x8x32xbf16, #tpu.memory_space<vmem>>, %arg3: memref<3x32x32xbf16, #tpu.memory_space<vmem>>, %arg4: memref<3x1x32xf32, #tpu.memory_space<vmem>>, %arg5: memref<1x8x32xbf16, #tpu.memory_space<vmem>>, %arg6: memref<1x8x32xbf16, #tpu.memory_space<vmem>>, %arg7: memref<1x8x32xbf16, #tpu.memory_space<vmem>>) attributes {dimension_semantics = [#tpu.dimension_semantics<parallel>, #tpu.dimension_semantics<parallel>], iteration_bounds = array<i64: 2, 1>, scalar_prefetch = 0 : i64, scratch_operands = 0 : i64, tpu.core_type = #tpu.core_type<tc>, window_params = [{transform_indices = @transform_0, window_bounds = array<i64: 1, 8, 32>}, {pipeline_mode = #tpu.pipeline_mode<synchronous>, transform_indices = @transform_1, window_bounds = array<i64: 3, 32, 32>}, {pipeline_mode = #tpu.pipeline_mode<synchronous>, transform_indices = @transform_2, window_bounds = array<i64: 3, 1, 32>}, {transform_indices = @transform_3, window_bounds = array<i64: 1, 8, 32>}, {transform_indices = @transform_4, window_bounds = array<i64: 1, 8, 32>}, {transform_indices = @transform_5, window_bounds = array<i64: 1, 8, 32>}]} {
    %c0 = arith.constant 0 : index
    %c0_0 = arith.constant 0 : index
    %c0_1 = arith.constant 0 : index
    %0 = vector.load %arg2[%c0, %c0_0, %c0_1] : memref<1x8x32xbf16, #tpu.memory_space<vmem>>, vector<1x8x32xbf16>
    %1 = vector.shape_cast %0 : vector<1x8x32xbf16> to vector<8x32xbf16>
    %c0_2 = arith.constant 0 : index
    %c0_3 = arith.constant 0 : index
    %c0_4 = arith.constant 0 : index
    %2 = vector.load %arg3[%c0_2, %c0_3, %c0_4] : memref<3x32x32xbf16, #tpu.memory_space<vmem>>, vector<1x32x32xbf16>
    %3 = vector.shape_cast %2 : vector<1x32x32xbf16> to vector<32x32xbf16>
    %cst = arith.constant dense<0.000000e+00> : vector<8x32xf32>
    %4 = tpu.matmul %1, %3, %cst {dimension_numbers = #tpu.dot_dimension_numbers<[1], [0], [0], [1], [0, 0, 1, 1], [], []>} : vector<8x32xbf16>, vector<32x32xbf16>, vector<8x32xf32> -> vector<8x32xf32>
    %c0_5 = arith.constant 0 : index
    %c0_6 = arith.constant 0 : index
    %c0_7 = arith.constant 0 : index
    %5 = vector.load %arg4[%c0_5, %c0_6, %c0_7] : memref<3x1x32xf32, #tpu.memory_space<vmem>>, vector<1x1x32xf32>
    %6 = vector.shape_cast %5 : vector<1x1x32xf32> to vector<1x32xf32>
    %7 = vector.broadcast %6 : vector<1x32xf32> to vector<8x32xf32>
    %8 = arith.addf %4, %7 : vector<8x32xf32>
    %9 = arith.truncf %8 : vector<8x32xf32> to vector<8x32xbf16>
    %c0_8 = arith.constant 0 : index
    %c0_9 = arith.constant 0 : index
    %c0_10 = arith.constant 0 : index
    %10 = vector.load %arg5[%c0_8, %c0_9, %c0_10] : memref<1x8x32xbf16, #tpu.memory_space<vmem>>, vector<1x8x32xbf16>
    %11 = vector.shape_cast %10 : vector<1x8x32xbf16> to vector<8x32xbf16>
    %12 = vector.shape_cast %9 : vector<8x32xbf16> to vector<1x8x32xbf16>
    tpu.vector_store %arg5[%c0_8, %c0_9, %c0_10], %12 {strides = array<i32>} : memref<1x8x32xbf16, #tpu.memory_space<vmem>>, vector<1x8x32xbf16>,
    %c1 = arith.constant 1 : index
    %c0_11 = arith.constant 0 : index
    %c0_12 = arith.constant 0 : index
    %13 = vector.load %arg3[%c1, %c0_11, %c0_12] : memref<3x32x32xbf16, #tpu.memory_space<vmem>>, vector<1x32x32xbf16>
    %14 = vector.shape_cast %13 : vector<1x32x32xbf16> to vector<32x32xbf16>
    %cst_13 = arith.constant dense<0.000000e+00> : vector<8x32xf32>
    %15 = tpu.matmul %1, %14, %cst_13 {dimension_numbers = #tpu.dot_dimension_numbers<[1], [0], [0], [1], [0, 0, 1, 1], [], []>} : vector<8x32xbf16>, vector<32x32xbf16>, vector<8x32xf32> -> vector<8x32xf32>
    %c1_14 = arith.constant 1 : index
    %c0_15 = arith.constant 0 : index
    %c0_16 = arith.constant 0 : index
    %16 = vector.load %arg4[%c1_14, %c0_15, %c0_16] : memref<3x1x32xf32, #tpu.memory_space<vmem>>, vector<1x1x32xf32>
    %17 = vector.shape_cast %16 : vector<1x1x32xf32> to vector<1x32xf32>
    %18 = vector.broadcast %17 : vector<1x32xf32> to vector<8x32xf32>
    %19 = arith.addf %15, %18 : vector<8x32xf32>
    %20 = arith.truncf %19 : vector<8x32xf32> to vector<8x32xbf16>
    %c0_17 = arith.constant 0 : index
    %c0_18 = arith.constant 0 : index
    %c0_19 = arith.constant 0 : index
    %21 = vector.load %arg6[%c0_17, %c0_18, %c0_19] : memref<1x8x32xbf16, #tpu.memory_space<vmem>>, vector<1x8x32xbf16>
    %22 = vector.shape_cast %21 : vector<1x8x32xbf16> to vector<8x32xbf16>
    %23 = vector.shape_cast %20 : vector<8x32xbf16> to vector<1x8x32xbf16>
    tpu.vector_store %arg6[%c0_17, %c0_18, %c0_19], %23 {strides = array<i32>} : memref<1x8x32xbf16, #tpu.memory_space<vmem>>, vector<1x8x32xbf16>,
    %c2 = arith.constant 2 : index
    %c0_20 = arith.constant 0 : index
    %c0_21 = arith.constant 0 : index
    %24 = vector.load %arg3[%c2, %c0_20, %c0_21] : memref<3x32x32xbf16, #tpu.memory_space<vmem>>, vector<1x32x32xbf16>
    %25 = vector.shape_cast %24 : vector<1x32x32xbf16> to vector<32x32xbf16>
    %cst_22 = arith.constant dense<0.000000e+00> : vector<8x32xf32>
    %26 = tpu.matmul %1, %25, %cst_22 {dimension_numbers = #tpu.dot_dimension_numbers<[1], [0], [0], [1], [0, 0, 1, 1], [], []>} : vector<8x32xbf16>, vector<32x32xbf16>, vector<8x32xf32> -> vector<8x32xf32>
    %c2_23 = arith.constant 2 : index
    %c0_24 = arith.constant 0 : index
    %c0_25 = arith.constant 0 : index
    %27 = vector.load %arg4[%c2_23, %c0_24, %c0_25] : memref<3x1x32xf32, #tpu.memory_space<vmem>>, vector<1x1x32xf32>
    %28 = vector.shape_cast %27 : vector<1x1x32xf32> to vector<1x32xf32>
    %29 = vector.broadcast %28 : vector<1x32xf32> to vector<8x32xf32>
    %30 = arith.addf %26, %29 : vector<8x32xf32>
    %31 = arith.truncf %30 : vector<8x32xf32> to vector<8x32xbf16>
    %c0_26 = arith.constant 0 : index
    %c0_27 = arith.constant 0 : index
    %c0_28 = arith.constant 0 : index
    %32 = vector.load %arg7[%c0_26, %c0_27, %c0_28] : memref<1x8x32xbf16, #tpu.memory_space<vmem>>, vector<1x8x32xbf16>
    %33 = vector.shape_cast %32 : vector<1x8x32xbf16> to vector<8x32xbf16>
    %34 = vector.shape_cast %31 : vector<8x32xbf16> to vector<1x8x32xbf16>
    tpu.vector_store %arg7[%c0_26, %c0_27, %c0_28], %34 {strides = array<i32>} : memref<1x8x32xbf16, #tpu.memory_space<vmem>>, vector<1x8x32xbf16>,
    return
  }
  func.func @transform_0(%arg0: i32, %arg1: i32) -> (i32, i32, i32) {
    %c0_i32 = arith.constant 0 : i32
    %c0_i32_0 = arith.constant 0 : i32
    return %arg0, %arg1, %c0_i32 : i32, i32, i32
  }
  func.func @transform_1(%arg0: i32, %arg1: i32) -> (i32, i32, i32) {
    %c0_i32 = arith.constant 0 : i32
    %c0_i32_0 = arith.constant 0 : i32
    %c0_i32_1 = arith.constant 0 : i32
    %c0_i32_2 = arith.constant 0 : i32
    return %c0_i32, %c0_i32_0, %c0_i32_1 : i32, i32, i32
  }
  func.func @transform_2(%arg0: i32, %arg1: i32) -> (i32, i32, i32) {
    %c0_i32 = arith.constant 0 : i32
    %c0_i32_0 = arith.constant 0 : i32
    %c0_i32_1 = arith.constant 0 : i32
    %c0_i32_2 = arith.constant 0 : i32
    return %c0_i32, %c0_i32_0, %c0_i32_1 : i32, i32, i32
  }
  func.func @transform_3(%arg0: i32, %arg1: i32) -> (i32, i32, i32) {
    %c0_i32 = arith.constant 0 : i32
    %c0_i32_0 = arith.constant 0 : i32
    return %arg0, %arg1, %c0_i32 : i32, i32, i32
  }
  func.func @transform_4(%arg0: i32, %arg1: i32) -> (i32, i32, i32) {
    %c0_i32 = arith.constant 0 : i32
    %c0_i32_0 = arith.constant 0 : i32
    return %arg0, %arg1, %c0_i32 : i32, i32, i32
  }
  func.func @transform_5(%arg0: i32, %arg1: i32) -> (i32, i32, i32) {
    %c0_i32 = arith.constant 0 : i32
    %c0_i32_0 = arith.constant 0 : i32
    return %arg0, %arg1, %c0_i32 : i32, i32, i32
  }
}

</mosaic_0001>

<llo_original>
// kernel: tpu_custom_call.1
$region0: #{tpu_custom_call.1}
  #allocation0 [shape = 'u32[]', space=smem, size = 0x4, offset = 0x4, fixed_abs, tag = 'smem constant byte address 0x4 - core index']
  #allocation1 [shape = 'u32[144,128]{1,0:T(1,128)}', space=vmem, size = 0x12000, scoped, tag = 'internal scratch']
  %s0 = inlined_call_operand.hbm [shape: bf16[2,8,32], index: 0, kind: input, shape index: {}]
  %s1 = inlined_call_operand.hbm [shape: bf16[3,32,32], index: 1, kind: input, shape index: {}]
  %s2 = inlined_call_operand.vmem [shape: f32[3,1,32], index: 2, kind: input, shape index: {}]
  %s3 = inlined_call_operand.hbm [shape: bf16[2,8,32], index: 3, kind: output, shape index: {0}]
  %s4 = inlined_call_operand.hbm [shape: bf16[2,8,32], index: 4, kind: output, shape index: {1}]
  %s5 = inlined_call_operand.hbm [shape: bf16[2,8,32], index: 5, kind: output, shape index: {2}]
  %6 = xla_tuple %s3, %s4, %s5
  %s7 = sld [smem:[#allocation0]]
  $region69: #{tpu_custom_call.1} parent=0
    _
  %s9 = ssub.s32 1, %s7
  %s10 = scalar_select 0, %s9, %s7
  $region1: #{tpu_custom_call.1} parent=0
    #allocation2 [shape = 'u8[4096]{0}', space=vmem, size = 0x1000, scoped, tag = 'input window, operand 0']
    #allocation3 [shape = 's32[2]{0}', space=sflag, size = 0x8, scoped, tag = 'scoped memory for tpu_custom_call.1']
    #allocation4 [shape = 's32[2]{0}', space=sflag, size = 0x8, scoped, tag = 'scoped memory for tpu_custom_call.1']
    #allocation5 [shape = 'u8[24576]{0}', space=vmem, size = 0x6000, scoped, tag = 'input window, operand 1, single buffered']
    #allocation6 [shape = 's32[1]{0}', space=sflag, size = 0x4, scoped, tag = 'scoped memory for tpu_custom_call.1']
    #allocation7 [shape = 'u8[4096]{0}', space=vmem, size = 0x1000, scoped, tag = 'output window, operand 0']
    #allocation8 [shape = 'u8[4096]{0}', space=vmem, size = 0x1000, scoped, tag = 'output window, operand 1']
    #allocation9 [shape = 's32[2]{0}', space=sflag, size = 0x8, scoped, tag = 'scoped memory for tpu_custom_call.1']
    #allocation10 [shape = 'u8[4096]{0}', space=vmem, size = 0x1000, scoped, tag = 'output window, operand 2']
    %11 = vsyncpa [#allocation3], 0
    %s12 = scalar_lea.sflag [#allocation3], 1
    %13 = vsyncpa %s12, 0
    %14 = vsyncpa [#allocation6], 0
    %15 = vsyncpa [#allocation4], 0
    %s16 = scalar_lea.sflag [#allocation4], 1
    %17 = vsyncpa %s16, 0
    %18 = vsyncpa [#allocation9], 0
    %s19 = scalar_lea.sflag [#allocation9], 1
    %20 = vsyncpa %s19, 0
    loop: start=0, step=1, limit=4
    $region2: #{tpu_custom_call.1} parent=1 // loop_pre_header
      _
    $region3: #{tpu_custom_call.1} parent=1 // loop_header
      %s22 = sphi 0, %s26
      %p23 = scmp.ge.s32.totalorder %s22, 4
      %s29 = sphi 0, %s41
      %s30 = sphi 0, %s37
      %s31 = sphi 0, %s29
      %s32 = sphi 0, %s30
      %s33 = sphi 0, %s31
      %s34 = sphi 0, %s32
      %s46 = sphi 0, %s48
      %s49 = sphi 0, %s46
      %s50 = sphi 0, %s49
      %s66 = sphi 0, %s50
      %s70 = sphi 0, %s70
      %s72 = sphi 0, %s70
      %s73 = sphi 0, %s72
      %s87 = sphi 0, %s73
      %s91 = sphi 0, %s91
      %s93 = sphi 0, %s91
      %s94 = sphi 0, %s93
      %s108 = sphi 0, %s94
      %s116 = sphi 0, %s118
      %s119 = sphi 0, %s116
      %s120 = sphi 0, %s119
      %s136 = sphi 0, %s120
      %s144 = sphi 0, %s146
      %s147 = sphi 0, %s144
      %s148 = sphi 0, %s147
      %s164 = sphi 0, %s148
      %s172 = sphi 0, %s174
      %s175 = sphi 0, %s172
      %s176 = sphi 0, %s175
      %s192 = sphi 0, %s176
    $region4: #{tpu_custom_call.1} parent=1 // loop_header_branch
      %25 = sbr.rel (%p23) target = $region8
    $region5: #{tpu_custom_call.1} parent=1 // loop_body
      %s27 = ssub.s32 %s22, 1
      %s28 = ssub.s32 %s22, 2
      %s35 = sadd.s32 1, %s30
      %p36 = scmp.ge.s32.totalorder %s35, 1
      %s37 = scalar_select %p36, 0, %s35
      %s38 = sadd.s32 1, %s29
      %s39 = scalar_select %p36, %s38, %s29
      %p40 = scmp.ge.s32.totalorder %s39, 2
      %s41 = scalar_select %p40, 0, %s39
      %s42 = ssub.s32 %s29, %s41
      %s43 = ssub.s32 %s30, %s37
      %s44 = sor.u32 %s42, %s43
      %p45 = scmp.eq.s32.totalorder %s44, 0
      %s47 = sadd.s32 %s46, 1
      %s48 = scalar_select %p45, %s46, %s47
      %p51 = pneg %p45
      %p52 = scmp.eq.s32.totalorder %s22, 1
      %p53 = por %p51, %p52
      %p54 = scmp.ne.s32.totalorder %s46, %s49
      %p55 = scmp.eq.s32.totalorder %s22, 0
      %p56 = por %p54, %p55
      %p57 = scmp.ne.s32.totalorder %s46, %s49
      %p58 = scmp.eq.s32.totalorder %s27, 1
      %p59 = por %p57, %p58
      %p60 = scmp.ne.s32.totalorder %s49, %s50
      %p61 = scmp.eq.s32.totalorder %s27, 0
      %p62 = por %p60, %p61
      %p63 = scmp.ne.s32.totalorder %s49, %s50
      %p64 = scmp.eq.s32.totalorder %s28, 1
      %p65 = por %p63, %p64
      %p67 = scmp.ne.s32.totalorder %s50, %s66
      %p68 = scmp.eq.s32.totalorder %s28, 0
      %p69 = por %p67, %p68
      %s71 = sadd.s32 %s70, 1
      %p74 = scmp.eq.s32.totalorder %s22, 1
      %p75 = scmp.ne.s32.totalorder %s70, %s72
      %p76 = scmp.eq.s32.totalorder %s22, 0
      %p77 = por %p75, %p76
      %p78 = scmp.ne.s32.totalorder %s70, %s72
      %p79 = scmp.eq.s32.totalorder %s27, 1
      %p80 = por %p78, %p79
      %p81 = scmp.ne.s32.totalorder %s72, %s73
      %p82 = scmp.eq.s32.totalorder %s27, 0
      %p83 = por %p81, %p82
      %p84 = scmp.ne.s32.totalorder %s72, %s73
      %p85 = scmp.eq.s32.totalorder %s28, 1
      %p86 = por %p84, %p85
      %p88 = scmp.ne.s32.totalorder %s73, %s87
      %p89 = scmp.eq.s32.totalorder %s28, 0
      %p90 = por %p88, %p89
      %s92 = sadd.s32 %s91, 1
      %p95 = scmp.eq.s32.totalorder %s22, 1
      %p96 = scmp.ne.s32.totalorder %s91, %s93
      %p97 = scmp.eq.s32.totalorder %s22, 0
      %p98 = por %p96, %p97
      %p99 = scmp.ne.s32.totalorder %s91, %s93
      %p100 = scmp.eq.s32.totalorder %s27, 1
      %p101 = por %p99, %p100
      %p102 = scmp.ne.s32.totalorder %s93, %s94
      %p103 = scmp.eq.s32.totalorder %s27, 0
      %p104 = por %p102, %p103
      %p105 = scmp.ne.s32.totalorder %s93, %s94
      %p106 = scmp.eq.s32.totalorder %s28, 1
      %p107 = por %p105, %p106
      %p109 = scmp.ne.s32.totalorder %s94, %s108
      %p110 = scmp.eq.s32.totalorder %s28, 0
      %p111 = por %p109, %p110
      %s112 = ssub.s32 %s29, %s41
      %s113 = ssub.s32 %s30, %s37
      %s114 = sor.u32 %s112, %s113
      %p115 = scmp.eq.s32.totalorder %s114, 0
      %s117 = sadd.s32 %s116, 1
      %s118 = scalar_select %p115, %s116, %s117
      %p121 = pneg %p115
      %p122 = scmp.eq.s32.totalorder %s22, 1
      %p123 = por %p121, %p122
      %p124 = scmp.ne.s32.totalorder %s116, %s119
      %p125 = scmp.eq.s32.totalorder %s22, 0
      %p126 = por %p124, %p125
      %p127 = scmp.ne.s32.totalorder %s116, %s119
      %p128 = scmp.eq.s32.totalorder %s27, 1
      %p129 = por %p127, %p128
      %p130 = scmp.ne.s32.totalorder %s119, %s120
      %p131 = scmp.eq.s32.totalorder %s27, 0
      %p132 = por %p130, %p131
      %p133 = scmp.ne.s32.totalorder %s119, %s120
      %p134 = scmp.eq.s32.totalorder %s28, 1
      %p135 = por %p133, %p134
      %p137 = scmp.ne.s32.totalorder %s120, %s136
      %p138 = scmp.eq.s32.totalorder %s28, 0
      %p139 = por %p137, %p138
      %s140 = ssub.s32 %s29, %s41
      %s141 = ssub.s32 %s30, %s37
      %s142 = sor.u32 %s140, %s141
      %p143 = scmp.eq.s32.totalorder %s142, 0
      %s145 = sadd.s32 %s144, 1
      %s146 = scalar_select %p143, %s144, %s145
      %p149 = pneg %p143
      %p150 = scmp.eq.s32.totalorder %s22, 1
      %p151 = por %p149, %p150
      %p152 = scmp.ne.s32.totalorder %s144, %s147
      %p153 = scmp.eq.s32.totalorder %s22, 0
      %p154 = por %p152, %p153
      %p155 = scmp.ne.s32.totalorder %s144, %s147
      %p156 = scmp.eq.s32.totalorder %s27, 1
      %p157 = por %p155, %p156
      %p158 = scmp.ne.s32.totalorder %s147, %s148
      %p159 = scmp.eq.s32.totalorder %s27, 0
      %p160 = por %p158, %p159
      %p161 = scmp.ne.s32.totalorder %s147, %s148
      %p162 = scmp.eq.s32.totalorder %s28, 1
      %p163 = por %p161, %p162
      %p165 = scmp.ne.s32.totalorder %s148, %s164
      %p166 = scmp.eq.s32.totalorder %s28, 0
      %p167 = por %p165, %p166
      %s168 = ssub.s32 %s29, %s41
      %s169 = ssub.s32 %s30, %s37
      %s170 = sor.u32 %s168, %s169
      %p171 = scmp.eq.s32.totalorder %s170, 0
      %s173 = sadd.s32 %s172, 1
      %s174 = scalar_select %p171, %s172, %s173
      %p177 = pneg %p171
      %p178 = scmp.eq.s32.totalorder %s22, 1
      %p179 = por %p177, %p178
      %p180 = scmp.ne.s32.totalorder %s172, %s175
      %p181 = scmp.eq.s32.totalorder %s22, 0
      %p182 = por %p180, %p181
      %p183 = scmp.ne.s32.totalorder %s172, %s175
      %p184 = scmp.eq.s32.totalorder %s27, 1
      %p185 = por %p183, %p184
      %p186 = scmp.ne.s32.totalorder %s175, %s176
      %p187 = scmp.eq.s32.totalorder %s27, 0
      %p188 = por %p186, %p187
      %p189 = scmp.ne.s32.totalorder %s175, %s176
      %p190 = scmp.eq.s32.totalorder %s28, 1
      %p191 = por %p189, %p190
      %p193 = scmp.ne.s32.totalorder %s176, %s192
      %p194 = scmp.eq.s32.totalorder %s28, 0
      %p195 = por %p193, %p194
      %p196 = scmp.le.s32.totalorder 1, %s22
      %p197 = scmp.lt.s32.totalorder %s22, 3
      %p198 = pnand %p196, %p197
      %p199 = pneg %p198
      // Predicated region
      $region9: #{tpu_custom_call.1} parent=5 // pred_check
        _
      $region10: #{tpu_custom_call.1} parent=5 // pred_check_branch
        %201 = sbr.rel (%p198) target = $region12
      $region11: #{tpu_custom_call.1} parent=5 // pred_region
        %s202 = ssub.s32 %s22, 1
        // Predicated region
        $region13: #{tpu_custom_call.1} parent=11 // pred_check
          %p203 = pneg %p83
        $region14: #{tpu_custom_call.1} parent=11 // pred_check_branch
          %205 = sbr.rel (%p203) target = $region16
        $region15: #{tpu_custom_call.1} parent=11 // pred_region
          %s207 = ssub.s32 768, 768
          %208 = vsyncadd [#allocation6], %s207
          %s209 = sshll.u32 [#allocation5], 4
          %s210 = int_to_ptr.vmem [resolvable:$true] %s209
          %215 = dma.hbm_to_vmem [thread:$0]  %s1, 768, %s210, [#allocation6], 64, 64, 4
        $region16: #{tpu_custom_call.1} parent=11 // pred_fallthru
          _
        // Predicated region
        $region17: #{tpu_custom_call.1} parent=11 // pred_check
          %p216 = pneg %p104
        $region18: #{tpu_custom_call.1} parent=11 // pred_check_branch
          %218 = sbr.rel (%p216) target = $region20
        $region19: #{tpu_custom_call.1} parent=11 // pred_region
          _
        $region20: #{tpu_custom_call.1} parent=11 // pred_fallthru
          _
      $region12: #{tpu_custom_call.1} parent=5 // pred_fallthru
        _
      %p219 = scmp.lt.s32.totalorder %s22, 2
      // Predicated region
      $region21: #{tpu_custom_call.1} parent=5 // pred_check
        %p220 = pneg %p219
      $region22: #{tpu_custom_call.1} parent=5 // pred_check_branch
        %222 = sbr.rel (%p220) target = $region24
      $region23: #{tpu_custom_call.1} parent=5 // pred_region
        // Predicated region
        $region25: #{tpu_custom_call.1} parent=23 // pred_check
          %p223 = pneg %p56
        $region26: #{tpu_custom_call.1} parent=23 // pred_check_branch
          %225 = sbr.rel (%p223) target = $region28
        $region27: #{tpu_custom_call.1} parent=23 // pred_region
          %s226 = sand.u32 %s46, 1
          %s227 = scalar_lea.sflag [#allocation3], %s226
          %s228 = sand.u32 %s46, 1
          %s229 = smul.addr %s228, 4
          %s230 = scalar_lea.vmem [#allocation2], %s229
          %s232 = ssub.s32 64, 64
          %233 = vsyncadd %s227, %s232
          %s234 = sadd.s32 %s30, %s29
          %s235 = smul.addr %s234, 64
          %s236 = scalar_lea.hbm %s0, %s235
          %s238 = sshll.u32 %s230, 4
          %s239 = int_to_ptr.vmem [resolvable:$true] %s238
          %241 = dma.hbm_to_vmem [thread:$0]  %s236, 64, %s239, %s227
        $region28: #{tpu_custom_call.1} parent=23 // pred_fallthru
          _
      $region24: #{tpu_custom_call.1} parent=5 // pred_fallthru
        _
      %p242 = scmp.le.s32.totalorder 1, %s22
      %p243 = scmp.lt.s32.totalorder %s22, 3
      %p244 = pnand %p242, %p243
      %p245 = pneg %p244
      // Predicated region
      $region29: #{tpu_custom_call.1} parent=5 // pred_check
        _
      $region30: #{tpu_custom_call.1} parent=5 // pred_check_branch
        %247 = sbr.rel (%p244) target = $region32
      $region31: #{tpu_custom_call.1} parent=5 // pred_region
        %s248 = ssub.s32 %s22, 1
        %s249 = sand.u32 %s49, 1
        %s250 = scalar_lea.sflag [#allocation3], %s249
        %s251 = sand.u32 %s49, 1
        %s252 = smul.addr %s251, 4
        %s253 = scalar_lea.vmem [#allocation2], %s252
        // Predicated region
        $region33: #{tpu_custom_call.1} parent=31 // pred_check
          %p254 = pneg %p62
        $region34: #{tpu_custom_call.1} parent=31 // pred_check_branch
          %256 = sbr.rel (%p254) target = $region36
        $region35: #{tpu_custom_call.1} parent=31 // pred_region
          %257 = dma.done %s250, 64
        $region36: #{tpu_custom_call.1} parent=31 // pred_fallthru
          _
        // Predicated region
        $region37: #{tpu_custom_call.1} parent=31 // pred_check
          %p258 = pneg %p83
        $region38: #{tpu_custom_call.1} parent=31 // pred_check_branch
          %260 = sbr.rel (%p258) target = $region40
        $region39: #{tpu_custom_call.1} parent=31 // pred_region
          %261 = dma.done [#allocation6], 768
        $region40: #{tpu_custom_call.1} parent=31 // pred_fallthru
          _
        %s262 = sand.u32 %s49, 1
        %s263 = scalar_lea.sflag [#allocation3], %s262
        %s264 = sand.u32 %s49, 1
        %s265 = smul.addr %s264, 4
        %s266 = scalar_lea.vmem [#allocation2], %s265
        %p267 = pneg %p62
        %p268 = pneg %p59
        %p269 = pneg %p83
        %p270 = pneg %p80
        %p271 = pneg %p104
        %p272 = pneg %p101
        %p273 = pneg %p132
        %p274 = pneg %p129
        %s275 = sand.u32 %s119, 1
        %s276 = scalar_lea.sflag [#allocation4], %s275
        %s277 = sand.u32 %s119, 1
        %s278 = smul.addr %s277, 4
        %s279 = scalar_lea.vmem [#allocation7], %s278
        %p280 = pneg %p160
        %p281 = pneg %p157
        %s282 = sand.u32 %s27, 1
        %s283 = scalar_lea.sflag [#allocation9], %s282
        %s284 = sand.u32 %s147, 1
        %s285 = smul.addr %s284, 4
        %s286 = scalar_lea.vmem [#allocation8], %s285
        %p287 = pneg %p188
        %p288 = pneg %p185
        %s289 = sand.u32 %s27, 1
        %s290 = scalar_lea.sflag [#allocation9], %s289
        %s291 = sand.u32 %s175, 1
        %s292 = smul.addr %s291, 4
        %s293 = scalar_lea.vmem [#allocation10], %s292
        %v295 = vld [vmem:[%s253] sm:$0xf]
        %v296 = vld [vmem:[#allocation5] sm:$0xf]
        %v297 = vld [vmem:[#allocation5 + $0x4] sm:$0xf]
        %v298 = vld [vmem:[#allocation5 + $0x8] sm:$0xf]
        %v299 = vld [vmem:[#allocation5 + $0xc] sm:$0xf]
        %v300 = vld [vmem:[%s2] sm:$0x1]
        %v302 = vlaneseq
        %v303 = vshrl.u32 %v302, 7
        %v304 = vsub.s32 0, %v303
        %v305 = vrot.slane %v300, %v304
        %v311 = vunpack.c.l.b16 %v296
        %v312 = vunpack.c.l.b16 %v297
        %v313 = vunpack.c.l.b16 %v298
        %v314 = vunpack.c.l.b16 %v299
        %v315 = vpack.c.b16 %v312, %v311
        %v316 = vpack.c.b16 %v314, %v313
        %vm319 = vcmask 261120
        %v321 = vsel %vm319, %v295, 0
        %323 = vmatprep.subr.bf16.mxu0 0
        %324 = vmatpush1.bf16.msra.mxu0 %v315
        %325 = vmatprep.subr.bf16.mxu0 0
        %326 = vmatpush1.bf16.msra.mxu0 %v316
        %327 = vmatprep.subr.bf16.mxu0 0
        %328 = vmatpush1.bf16.msra.mxu0 0
        %329 = vmatprep.subr.bf16.mxu0 0
        %330 = vmatpush1.bf16.msra.mxu0 0
        %331 = vmatprep.subr.bf16.mxu0 0
        %332 = vmatpush1.bf16.msra.mxu0 0
        %333 = vmatprep.subr.bf16.mxu0 0
        %334 = vmatpush1.bf16.msra.mxu0 0
        %335 = vmatprep.subr.bf16.mxu0 0
        %336 = vmatpush1.bf16.msra.mxu0 0
        %337 = vmatprep.subr.bf16.mxu0 0
        %338 = vmatpush1.bf16.msra.mxu0 0
        %339 = vmatprep.subr.bf16.mxu0 0
        %340 = vmatpush1.bf16.msra.mxu0 0
        %341 = vmatprep.subr.bf16.mxu0 0
        %342 = vmatpush1.bf16.msra.mxu0 0
        %343 = vmatprep.subr.bf16.mxu0 0
        %344 = vmatpush1.bf16.msra.mxu0 0
        %345 = vmatprep.subr.bf16.mxu0 0
        %346 = vmatpush1.bf16.msra.mxu0 0
        %347 = vmatprep.subr.bf16.mxu0 0
        %348 = vmatpush1.bf16.msra.mxu0 0
        %349 = vmatprep.subr.bf16.mxu0 0
        %350 = vmatpush1.bf16.msra.mxu0 0
        %351 = vmatprep.subr.bf16.mxu0 0
        %352 = vmatpush1.bf16.msra.mxu0 0
        %353 = vmatprep.subr.bf16.mxu0 0
        %354 = vmatpush1.bf16.msra.mxu0 0
        %355 = vmatprep.mubr.bf16.mxu0 0
        %356 = vmatmul.mubr.bf16.gmra.mrb[0].mxu0 %v321
        %v357 = vpop.f32.mrb[0].mxu0
        %v358 = vadd.f32 %v305, %v357
        %v359 = vpop.f32.mrb[0].mxu0
        %v360 = vpop.f32.mrb[0].mxu0
        %v361 = vpop.f32.mrb[0].mxu0
        %362 = vdwg.mxu0
        %v363 = vpack.c.bf16 %v358, %v358
        %vm364 = vcmask 257024
        %365 = vst.msk [vmem:[%s279] sm:$0xf] %vm364, %v363
        %s366 = scalar_lea.vmem [#allocation5], 16
        %v367 = vld [vmem:[%s366] sm:$0xf]
        %v368 = vld [vmem:[%s366 + $0x4] sm:$0xf]
        %v369 = vld [vmem:[%s366 + $0x8] sm:$0xf]
        %v370 = vld [vmem:[%s366 + $0xc] sm:$0xf]
        %s371 = scalar_lea.vmem %s2, 1
        %v372 = vld [vmem:[%s371] sm:$0x1]
        %v374 = vlaneseq
        %v375 = vshrl.u32 %v374, 7
        %v376 = vsub.s32 0, %v375
        %v377 = vrot.slane %v372, %v376
        %v383 = vunpack.c.l.b16 %v367
        %v384 = vunpack.c.l.b16 %v368
        %v385 = vunpack.c.l.b16 %v369
        %v386 = vunpack.c.l.b16 %v370
        %v387 = vpack.c.b16 %v384, %v383
        %v388 = vpack.c.b16 %v386, %v385
        %391 = vmatprep.subr.bf16.mxu0 0
        %392 = vmatpush1.bf16.msra.mxu0 %v387
        %393 = vmatprep.subr.bf16.mxu0 0
        %394 = vmatpush1.bf16.msra.mxu0 %v388
        %395 = vmatprep.subr.bf16.mxu0 0
        %396 = vmatpush1.bf16.msra.mxu0 0
        %397 = vmatprep.subr.bf16.mxu0 0
        %398 = vmatpush1.bf16.msra.mxu0 0
        %399 = vmatprep.subr.bf16.mxu0 0
        %400 = vmatpush1.bf16.msra.mxu0 0
        %401 = vmatprep.subr.bf16.mxu0 0
        %402 = vmatpush1.bf16.msra.mxu0 0
        %403 = vmatprep.subr.bf16.mxu0 0
        %404 = vmatpush1.bf16.msra.mxu0 0
        %405 = vmatprep.subr.bf16.mxu0 0
        %406 = vmatpush1.bf16.msra.mxu0 0
        %407 = vmatprep.subr.bf16.mxu0 0
        %408 = vmatpush1.bf16.msra.mxu0 0
        %409 = vmatprep.subr.bf16.mxu0 0
        %410 = vmatpush1.bf16.msra.mxu0 0
        %411 = vmatprep.subr.bf16.mxu0 0
        %412 = vmatpush1.bf16.msra.mxu0 0
        %413 = vmatprep.subr.bf16.mxu0 0
        %414 = vmatpush1.bf16.msra.mxu0 0
        %415 = vmatprep.subr.bf16.mxu0 0
        %416 = vmatpush1.bf16.msra.mxu0 0
        %417 = vmatprep.subr.bf16.mxu0 0
        %418 = vmatpush1.bf16.msra.mxu0 0
        %419 = vmatprep.subr.bf16.mxu0 0
        %420 = vmatpush1.bf16.msra.mxu0 0
        %421 = vmatprep.subr.bf16.mxu0 0
        %422 = vmatpush1.bf16.msra.mxu0 0
        %423 = vmatprep.mubr.bf16.mxu0 0
        %424 = vmatmul.mubr.bf16.gmra.mrb[0].mxu0 %v321
        %v425 = vpop.f32.mrb[0].mxu0
        %v426 = vadd.f32 %v377, %v425
        %v427 = vpop.f32.mrb[0].mxu0
        %v428 = vpop.f32.mrb[0].mxu0
        %v429 = vpop.f32.mrb[0].mxu0
        %430 = vdwg.mxu0
        %v431 = vpack.c.bf16 %v426, %v426
        %432 = vst.msk [vmem:[%s286] sm:$0xf] %vm364, %v431
        %s433 = scalar_lea.vmem [#allocation5], 32
        %v434 = vld [vmem:[%s433] sm:$0xf]
        %v435 = vld [vmem:[%s433 + $0x4] sm:$0xf]
        %v436 = vld [vmem:[%s433 + $0x8] sm:$0xf]
        %v437 = vld [vmem:[%s433 + $0xc] sm:$0xf]
        %s438 = scalar_lea.vmem %s2, 2
        %v439 = vld [vmem:[%s438] sm:$0x1]
        %v441 = vlaneseq
        %v442 = vshrl.u32 %v441, 7
        %v443 = vsub.s32 0, %v442
        %v444 = vrot.slane %v439, %v443
        %v450 = vunpack.c.l.b16 %v434
        %v451 = vunpack.c.l.b16 %v435
        %v452 = vunpack.c.l.b16 %v436
        %v453 = vunpack.c.l.b16 %v437
        %v454 = vpack.c.b16 %v451, %v450
        %v455 = vpack.c.b16 %v453, %v452
        %458 = vmatprep.subr.bf16.mxu0 0
        %459 = vmatpush1.bf16.msra.mxu0 %v454
        %460 = vmatprep.subr.bf16.mxu0 0
        %461 = vmatpush1.bf16.msra.mxu0 %v455
        %462 = vmatprep.subr.bf16.mxu0 0
        %463 = vmatpush1.bf16.msra.mxu0 0
        %464 = vmatprep.subr.bf16.mxu0 0
        %465 = vmatpush1.bf16.msra.mxu0 0
        %466 = vmatprep.subr.bf16.mxu0 0
        %467 = vmatpush1.bf16.msra.mxu0 0
        %468 = vmatprep.subr.bf16.mxu0 0
        %469 = vmatpush1.bf16.msra.mxu0 0
        %470 = vmatprep.subr.bf16.mxu0 0
        %471 = vmatpush1.bf16.msra.mxu0 0
        %472 = vmatprep.subr.bf16.mxu0 0
        %473 = vmatpush1.bf16.msra.mxu0 0
        %474 = vmatprep.subr.bf16.mxu0 0
        %475 = vmatpush1.bf16.msra.mxu0 0
        %476 = vmatprep.subr.bf16.mxu0 0
        %477 = vmatpush1.bf16.msra.mxu0 0
        %478 = vmatprep.subr.bf16.mxu0 0
        %479 = vmatpush1.bf16.msra.mxu0 0
        %480 = vmatprep.subr.bf16.mxu0 0
        %481 = vmatpush1.bf16.msra.mxu0 0
        %482 = vmatprep.subr.bf16.mxu0 0
        %483 = vmatpush1.bf16.msra.mxu0 0
        %484 = vmatprep.subr.bf16.mxu0 0
        %485 = vmatpush1.bf16.msra.mxu0 0
        %486 = vmatprep.subr.bf16.mxu0 0
        %487 = vmatpush1.bf16.msra.mxu0 0
        %488 = vmatprep.subr.bf16.mxu0 0
        %489 = vmatpush1.bf16.msra.mxu0 0
        %490 = vmatprep.mubr.bf16.mxu0 0
        %491 = vmatmul.mubr.bf16.gmra.mrb[0].mxu0 %v321
        %v492 = vpop.f32.mrb[0].mxu0
        %v493 = vadd.f32 %v444, %v492
        %v494 = vpop.f32.mrb[0].mxu0
        %v495 = vpop.f32.mrb[0].mxu0
        %v496 = vpop.f32.mrb[0].mxu0
        %497 = vdwg.mxu0
        %v498 = vpack.c.bf16 %v493, %v493
        %499 = vst.msk [vmem:[%s293] sm:$0xf] %vm364, %v498
        %s500 = sand.u32 %s119, 1
        %s501 = scalar_lea.sflag [#allocation4], %s500
        %s502 = sand.u32 %s119, 1
        %s503 = smul.addr %s502, 4
        %s504 = scalar_lea.vmem [#allocation7], %s503
        %s505 = sand.u32 %s27, 1
        %s506 = scalar_lea.sflag [#allocation9], %s505
        %s507 = sand.u32 %s147, 1
        %s508 = smul.addr %s507, 4
        %s509 = scalar_lea.vmem [#allocation8], %s508
        %s510 = sand.u32 %s27, 1
        %s511 = scalar_lea.sflag [#allocation9], %s510
        %s512 = sand.u32 %s175, 1
        %s513 = smul.addr %s512, 4
        %s514 = scalar_lea.vmem [#allocation10], %s513
        // Predicated region
        $region41: #{tpu_custom_call.1} parent=31 // pred_check
          %p515 = pneg %p129
        $region42: #{tpu_custom_call.1} parent=31 // pred_check_branch
          %517 = sbr.rel (%p515) target = $region44
        $region43: #{tpu_custom_call.1} parent=31 // pred_region
          %s519 = ssub.s32 64, 64
          %520 = vsyncadd %s501, %s519
          %s521 = sadd.s32 %s32, %s31
          %s522 = smul.addr %s521, 64
          %s523 = scalar_lea.hbm %s3, %s522
          %s525 = sshll.u32 %s504, 4
          %s526 = int_to_ptr.vmem [resolvable:$true] %s525
          %528 = dma.vmem_to_hbm [thread:$0]  %s526, 64, %s523, %s501
        $region44: #{tpu_custom_call.1} parent=31 // pred_fallthru
          _
        // Predicated region
        $region45: #{tpu_custom_call.1} parent=31 // pred_check
          %p529 = pneg %p157
        $region46: #{tpu_custom_call.1} parent=31 // pred_check_branch
          %531 = sbr.rel (%p529) target = $region48
        $region47: #{tpu_custom_call.1} parent=31 // pred_region
          %s533 = ssub.s32 64, 64
          %534 = vsyncadd %s506, %s533
          %s535 = sadd.s32 %s32, %s31
          %s536 = smul.addr %s535, 64
          %s537 = scalar_lea.hbm %s4, %s536
          %s539 = sshll.u32 %s509, 4
          %s540 = int_to_ptr.vmem [resolvable:$true] %s539
          %542 = dma.vmem_to_hbm [thread:$0]  %s540, 64, %s537, %s506
        $region48: #{tpu_custom_call.1} parent=31 // pred_fallthru
          _
        // Predicated region
        $region49: #{tpu_custom_call.1} parent=31 // pred_check
          %p543 = pneg %p185
        $region50: #{tpu_custom_call.1} parent=31 // pred_check_branch
          %545 = sbr.rel (%p543) target = $region52
        $region51: #{tpu_custom_call.1} parent=31 // pred_region
          %s547 = ssub.s32 64, 64
          %548 = vsyncadd %s511, %s547
          %s549 = sadd.s32 %s32, %s31
          %s550 = smul.addr %s549, 64
          %s551 = scalar_lea.hbm %s5, %s550
          %s553 = sshll.u32 %s514, 4
          %s554 = int_to_ptr.vmem [resolvable:$true] %s553
          %556 = dma.vmem_to_hbm [thread:$0]  %s554, 64, %s551, %s511
        $region52: #{tpu_custom_call.1} parent=31 // pred_fallthru
          _
      $region32: #{tpu_custom_call.1} parent=5 // pred_fallthru
        _
      %p557 = scmp.le.s32.totalorder 2, %s22
      // Predicated region
      $region53: #{tpu_custom_call.1} parent=5 // pred_check
        %p558 = pneg %p557
      $region54: #{tpu_custom_call.1} parent=5 // pred_check_branch
        %560 = sbr.rel (%p558) target = $region56
      $region55: #{tpu_custom_call.1} parent=5 // pred_region
        %s561 = ssub.s32 %s22, 2
        // Predicated region
        $region57: #{tpu_custom_call.1} parent=55 // pred_check
          %p562 = pneg %p135
        $region58: #{tpu_custom_call.1} parent=55 // pred_check_branch
          %564 = sbr.rel (%p562) target = $region60
        $region59: #{tpu_custom_call.1} parent=55 // pred_region
          %s565 = sand.u32 %s120, 1
          %s566 = scalar_lea.sflag [#allocation4], %s565
          %s567 = sand.u32 %s120, 1
          %s568 = smul.addr %s567, 4
          %s569 = scalar_lea.vmem [#allocation7], %s568
          %570 = dma.done %s566, 64
        $region60: #{tpu_custom_call.1} parent=55 // pred_fallthru
          _
        // Predicated region
        $region61: #{tpu_custom_call.1} parent=55 // pred_check
          %p571 = pneg %p163
        $region62: #{tpu_custom_call.1} parent=55 // pred_check_branch
          %573 = sbr.rel (%p571) target = $region64
        $region63: #{tpu_custom_call.1} parent=55 // pred_region
          %s574 = sand.u32 %s28, 1
          %s575 = scalar_lea.sflag [#allocation9], %s574
          %s576 = sand.u32 %s148, 1
          %s577 = smul.addr %s576, 4
          %s578 = scalar_lea.vmem [#allocation8], %s577
          %579 = dma.done %s575, 64
        $region64: #{tpu_custom_call.1} parent=55 // pred_fallthru
          _
        // Predicated region
        $region65: #{tpu_custom_call.1} parent=55 // pred_check
          %p580 = pneg %p191
        $region66: #{tpu_custom_call.1} parent=55 // pred_check_branch
          %582 = sbr.rel (%p580) target = $region68
        $region67: #{tpu_custom_call.1} parent=55 // pred_region
          %s583 = sand.u32 %s28, 1
          %s584 = scalar_lea.sflag [#allocation9], %s583
          %s585 = sand.u32 %s176, 1
          %s586 = smul.addr %s585, 4
          %s587 = scalar_lea.vmem [#allocation10], %s586
          %588 = dma.done %s584, 64
        $region68: #{tpu_custom_call.1} parent=55 // pred_fallthru
          _
      $region56: #{tpu_custom_call.1} parent=5 // pred_fallthru
        _
    $region6: #{tpu_custom_call.1} parent=1 // loop_footer
      %s26 = sadd.s32 1, %s22
    $region7: #{tpu_custom_call.1} parent=1 // loop_footer_branch
      %21 = sbr.rel target = $region3
    $region8: #{tpu_custom_call.1} parent=1 // loop_exit
      _
    %589 = vsyncpa [#allocation3], 1
    %s590 = scalar_lea.sflag [#allocation3], 1
    %591 = vsyncpa %s590, 1
    %592 = vsyncpa [#allocation6], 1
    %593 = vsyncpa [#allocation4], 1
    %s594 = scalar_lea.sflag [#allocation4], 1
    %595 = vsyncpa %s594, 1
    %596 = vsyncpa [#allocation9], 1
    %s597 = scalar_lea.sflag [#allocation9], 1
    %598 = vsyncpa %s597, 1

</llo_original>
